<compile_context>
chip_gen: v7x
topology: tpu7x:2x2x1
jax: 0.10.0
libtpu: 0.0.40
codegen_flags: <defaults>
</compile_context>

<pallas_src>
import functools

import numpy as np

import jax
import jax.numpy as jnp
from jax import lax
from jax.experimental import pallas as pl
from jax.experimental.pallas import tpu as pltpu

PAST_N_DAYS = 8      # T
HIDDEN = 32          # MLP hidden width
POPULATION = 1000.0  # self.N

LANES = 128
# Packed-slab row layout (all blocks 8-row aligned).
ROW_W1 = 0      # (128,128): rows 0..4T-1, cols 0..H-1 hold W1
ROW_W2 = 128    # (128,128): rows 0..H-1,  cols 0..2   hold W2
ROW_Z = 256     # (128,128): sliding-window shift matrix (drop oldest day)
ROW_MQ = 384    # (128,128): u=[flow, gI, dI] -> Euler increments at 4T-4..4T-1
ROW_B1 = 512    # row ROW_B1: b1 in lanes 0..H-1
ROW_B2 = 520    # row ROW_B2: b2 in lanes 0..2
SLAB_ROWS = 528


def pack_sird_params(w1, b1, w2, b2, *, past_n_days=PAST_N_DAYS):
    """Pack the MLP weights + constant lane-selection matrices into one slab."""
    in_dim = 4 * past_n_days
    hidden = int(w1.shape[1])
    assert past_n_days >= 2 and in_dim <= LANES and hidden <= LANES
    assert w1.shape == (in_dim, hidden) and w2.shape == (hidden, 3)

    slab = np.zeros((SLAB_ROWS, LANES), np.float32)
    slab[ROW_W1:ROW_W1 + in_dim, :hidden] = np.asarray(w1, np.float32)
    slab[ROW_W2:ROW_W2 + hidden, :3] = np.asarray(w2, np.float32)
    slab[ROW_B1, :hidden] = np.asarray(b1, np.float32).reshape(-1)
    slab[ROW_B2, :3] = np.asarray(b2, np.float32).reshape(-1)
    # Z: (hist @ Z)[j] = hist[j + 4] for j < 4T-4, else 0  (drop day 0).
    for i in range(4, in_dim):
        slab[ROW_Z + i, i - 4] = 1.0
    # MQ: u = [flow, gamma*I, delta*I] (lanes 0..2) -> Euler increments
    #     [-flow, flow - gamma*I - delta*I, gamma*I, delta*I] at lanes 4T-4..4T-1.
    m = np.array([[-1.0, 1.0, 0.0, 0.0],
                  [0.0, -1.0, 1.0, 0.0],
                  [0.0, -1.0, 0.0, 1.0]], np.float32)
    slab[ROW_MQ:ROW_MQ + 3, in_dim - 4:in_dim] = m
    return jnp.asarray(slab)


def _sird_kernel(hist_ref, slab_ref, out_ref, hist_scr,
                 *, n_steps, in_dim, inv_population):
    lane = lax.broadcasted_iota(jnp.int32, (1, LANES), 1)
    m_s = lane == (in_dim - 4)                        # S_t lane of the last day
    m_i = lane == (in_dim - 3)                        # I_t lane
    m_last = (lane >= in_dim - 4) & (lane < in_dim)   # last-day lanes
    m_par = lane < 3                                  # beta/gamma/delta lanes
    m_flow = lane == 0

    b1 = slab_ref[ROW_B1:ROW_B1 + 1, :]               # (1,128), loaded once
    b2 = slab_ref[ROW_B2:ROW_B2 + 1, :]

    out_ref[...] = jnp.zeros_like(out_ref)
    hist_scr[...] = hist_ref[...]                     # row 0 = flattened history

    @pl.loop(0, n_steps)
    def _(step):
        hist = hist_scr[...]                          # (8,128); only row 0 live
        # nn_model: 2-layer MLP; weights stream from the VMEM-resident slab (MXU).
        h = jnp.tanh(
            jnp.dot(hist, slab_ref[ROW_W1:ROW_W1 + LANES, :],
                    preferred_element_type=jnp.float32) + b1)
        r = jax.nn.sigmoid(
            jnp.dot(h, slab_ref[ROW_W2:ROW_W2 + LANES, :],
                    preferred_element_type=jnp.float32) + b2)
        # S_t, I_t via lane-masked reductions (no scalar extracts).
        s_t = jnp.sum(jnp.where(m_s, hist, 0.0), axis=-1, keepdims=True)
        i_t = jnp.sum(jnp.where(m_i, hist, 0.0), axis=-1, keepdims=True)
        # u = [beta*S*I/N, gamma*I, delta*I, 0, ...] stays lane-resident.
        scale = jnp.where(m_flow, s_t * inv_population,
                          jnp.where(m_par, 1.0, 0.0)) * i_t
        u = r * scale
        # Euler increments placed at lanes 4T-4..4T-1 via constant matrix (MXU).
        dq = jnp.dot(u, slab_ref[ROW_MQ:ROW_MQ + LANES, :],
                     preferred_element_type=jnp.float32)
        state_new = jnp.where(m_last, hist, 0.0) + dq
        # Lane-dense output row: params in lanes 0..2, new state in 4T-4..4T-1.
        out_ref[pl.ds(step, 1), :] = (state_new + jnp.where(m_par, r, 0.0))[0:1, :]
        # Slide the history window: drop day 0 (MXU shift), append the new state.
        hist_scr[...] = jnp.dot(hist, slab_ref[ROW_Z:ROW_Z + LANES, :],
                                preferred_element_type=jnp.float32) + state_new


def sird_rollout(input_sird_values, packed_slab, *, n_steps=1,
                 population=POPULATION):
    """Run n_steps autoregressive SIRD Euler steps in a single pallas_call.

    Returns (states, params): (n_steps, 4) next-day SIRD states and
    (n_steps, 3) [beta, gamma, delta] predicted at each step.
    """
    t = int(input_sird_values.shape[0])
    in_dim = 4 * t
    assert t >= 2 and n_steps >= 1
    assert packed_slab.shape == (SLAB_ROWS, LANES)

    hist0 = jnp.zeros((8, LANES), jnp.float32)
    hist0 = hist0.at[0, :in_dim].set(
        jnp.asarray(input_sird_values, jnp.float32).reshape(-1))
    n_rows = ((n_steps + 7) // 8) * 8

    kernel = functools.partial(
        _sird_kernel, n_steps=int(n_steps), in_dim=in_dim,
        inv_population=1.0 / float(population))
    vmem = pl.BlockSpec(memory_space=pltpu.MemorySpace.VMEM)
    out = pl.pallas_call(
        kernel,
        out_shape=jax.ShapeDtypeStruct((n_rows, LANES), jnp.float32),
        in_specs=[vmem, vmem],
        out_specs=vmem,
        scratch_shapes=[pltpu.VMEM((8, LANES), jnp.float32)],
    )(hist0, packed_slab)
    return out[:n_steps, in_dim - 4:in_dim], out[:n_steps, 0:3]


def sird_forward(input_sird_values, packed_slab, *, population=POPULATION):
    """Single-step forward with the original module's semantics."""
    states, params = sird_rollout(input_sird_values, packed_slab,
                                  n_steps=1, population=population)
    return states[0], params[0]


def _reference_rollout(x, w1, b1, w2, b2, n_steps, population):
    """Pure-JAX reference: repeated application of the module's forward."""
    hist = jnp.asarray(x, jnp.float32)
    states, params = [], []
    for _ in range(n_steps):
        xf = hist.reshape(1, -1)
        h = jnp.tanh(xf @ w1 + b1)
        r = jax.nn.sigmoid(h @ w2 + b2)[0]
        beta, gamma, delta = r[0], r[1], r[2]
        s, i, rr, d = hist[-1, 0], hist[-1, 1], hist[-1, 2], hist[-1, 3]
        flow = beta * (s * i) / population
        new = jnp.stack([s - flow,
                         i + flow - gamma * i - delta * i,
                         rr + gamma * i,
                         d + delta * i])
        states.append(new)
        params.append(r)
        hist = jnp.concatenate([hist[1:], new[None, :]], axis=0)
    return jnp.stack(states), jnp.stack(params)


if __name__ == "__main__":
    key = jax.random.PRNGKey(0)
    k_x, k_w1, k_b1, k_w2, k_b2 = jax.random.split(key, 5)

    T, H = PAST_N_DAYS, HIDDEN
    in_dim = T * 4

    # Deterministic synthetic nn_model weights (scaled so activations are O(1)).
    w1 = jax.random.normal(k_w1, (in_dim, H), jnp.float32) / (
        jnp.sqrt(in_dim) * POPULATION)
    b1 = jax.random.normal(k_b1, (H,), jnp.float32) * 0.1
    w2 = jax.random.normal(k_w2, (H, 3), jnp.float32) / jnp.sqrt(H)
    b2 = jax.random.normal(k_b2, (3,), jnp.float32) * 0.1

    # Synthetic SIRD history: S, I, R, D fractions of the population.
    frac = jax.nn.softmax(jax.random.normal(k_x, (T, 4), jnp.float32), axis=-1)
    input_sird_values = frac * POPULATION

    packed_slab = pack_sird_params(w1, b1, w2, b2, past_n_days=T)

    # --- single-step forward (exact module semantics) ---
    out, params = sird_forward(input_sird_values, packed_slab)
    out, params = jax.block_until_ready((out, params))
    # Mirrors the PyTorch return: (tensor, dict of Python floats via .item()).
    sir_params = {"beta": float(params[0]),
                  "gamma": float(params[1]),
                  "delta": float(params[2])}

    ref_out, ref_params = _reference_rollout(
        input_sird_values, w1, b1, w2, b2, 1, POPULATION)
    assert jnp.allclose(out, ref_out[0], rtol=1e-4, atol=1e-2)
    assert jnp.allclose(params, ref_params[0], rtol=1e-4, atol=1e-4)
    assert set(sir_params) == {"beta", "gamma", "delta"}

    # --- fused multi-step rollout in ONE pallas_call (perf-review structure) ---
    N_STEPS = 16
    traj, traj_params = sird_rollout(input_sird_values, packed_slab,
                                     n_steps=N_STEPS)
    traj, traj_params = jax.block_until_ready((traj, traj_params))
    ref_traj, ref_traj_params = _reference_rollout(
        input_sird_values, w1, b1, w2, b2, N_STEPS, POPULATION)
    assert jnp.allclose(traj, ref_traj, rtol=1e-4, atol=5e-2)
    assert jnp.allclose(traj_params, ref_traj_params, rtol=1e-4, atol=1e-4)

    print("KERNEL_OK")
</pallas_src>

<mosaic_0001>
module attributes {stable_mosaic.version = 11 : i64} {
  func.func @_sird_kernel(%arg0: memref<8x128xf32, #tpu.memory_space<vmem>>, %arg1: memref<528x128xf32, #tpu.memory_space<vmem>>, %arg2: memref<8x128xf32, #tpu.memory_space<vmem>>, %arg3: memref<8x128xf32, #tpu.memory_space<vmem>>) attributes {dimension_semantics = [], scalar_prefetch = 0 : i64, scratch_operands = 1 : i64, tpu.core_type = #tpu.core_type<tc>} {
    %0 = tpu.iota {dimensions = array<i32: 1>} : vector<1x128xi32>
    %c28_i32 = arith.constant 28 : i32
    %1 = vector.broadcast %c28_i32 : i32 to vector<1x128xi32>
    %2 = arith.cmpi eq, %0, %1 : vector<1x128xi32>
    %c29_i32 = arith.constant 29 : i32
    %3 = vector.broadcast %c29_i32 : i32 to vector<1x128xi32>
    %4 = arith.cmpi eq, %0, %3 : vector<1x128xi32>
    %c28_i32_0 = arith.constant 28 : i32
    %5 = vector.broadcast %c28_i32_0 : i32 to vector<1x128xi32>
    %6 = arith.cmpi sge, %0, %5 : vector<1x128xi32>
    %c32_i32 = arith.constant 32 : i32
    %7 = vector.broadcast %c32_i32 : i32 to vector<1x128xi32>
    %8 = arith.cmpi slt, %0, %7 : vector<1x128xi32>
    %9 = arith.andi %6, %8 : vector<1x128xi1>
    %c3_i32 = arith.constant 3 : i32
    %10 = vector.broadcast %c3_i32 : i32 to vector<1x128xi32>
    %11 = arith.cmpi slt, %0, %10 : vector<1x128xi32>
    %c0_i32 = arith.constant 0 : i32
    %12 = vector.broadcast %c0_i32 : i32 to vector<1x128xi32>
    %13 = arith.cmpi eq, %0, %12 : vector<1x128xi32>
    %c512 = arith.constant 512 : index
    %c0 = arith.constant 0 : index
    %14 = vector.load %arg1[%c512, %c0] : memref<528x128xf32, #tpu.memory_space<vmem>>, vector<1x128xf32>
    %c520 = arith.constant 520 : index
    %c0_1 = arith.constant 0 : index
    %15 = vector.load %arg1[%c520, %c0_1] : memref<528x128xf32, #tpu.memory_space<vmem>>, vector<1x128xf32>
    %cst = arith.constant 0.000000e+00 : f32
    %16 = vector.broadcast %cst : f32 to vector<8x128xf32>
    %c0_2 = arith.constant 0 : index
    %c0_3 = arith.constant 0 : index
    %17 = vector.load %arg2[%c0_2, %c0_3] : memref<8x128xf32, #tpu.memory_space<vmem>>, vector<8x128xf32>
    tpu.vector_store %arg2[%c0_2, %c0_3], %16 {strides = array<i32>} : memref<8x128xf32, #tpu.memory_space<vmem>>, vector<8x128xf32>,
    %c0_4 = arith.constant 0 : index
    %c0_5 = arith.constant 0 : index
    %18 = vector.load %arg0[%c0_4, %c0_5] : memref<8x128xf32, #tpu.memory_space<vmem>>, vector<8x128xf32>
    %c0_6 = arith.constant 0 : index
    %c0_7 = arith.constant 0 : index
    %19 = vector.load %arg3[%c0_6, %c0_7] : memref<8x128xf32, #tpu.memory_space<vmem>>, vector<8x128xf32>
    tpu.vector_store %arg3[%c0_6, %c0_7], %18 {strides = array<i32>} : memref<8x128xf32, #tpu.memory_space<vmem>>, vector<8x128xf32>,
    %c0_i32_8 = arith.constant 0 : i32
    %c1_i32 = arith.constant 1 : i32
    %20 = arith.muli %c0_i32_8, %c1_i32 : i32
    %c0_i32_9 = arith.constant 0 : i32
    %21 = arith.addi %c0_i32_9, %20 : i32
    %c0_10 = arith.constant 0 : index
    %c0_11 = arith.constant 0 : index
    %22 = vector.load %arg3[%c0_10, %c0_11] : memref<8x128xf32, #tpu.memory_space<vmem>>, vector<8x128xf32>
    %c0_12 = arith.constant 0 : index
    %c0_13 = arith.constant 0 : index
    %23 = vector.load %arg1[%c0_12, %c0_13] : memref<528x128xf32, #tpu.memory_space<vmem>>, vector<128x128xf32>
    %cst_14 = arith.constant dense<0.000000e+00> : vector<8x128xf32>
    %24 = tpu.matmul %22, %23, %cst_14 {dimension_numbers = #tpu.dot_dimension_numbers<[1], [0], [0], [1], [0, 0, 1, 1], [], []>} : vector<8x128xf32>, vector<128x128xf32>, vector<8x128xf32> -> vector<8x128xf32>
    %25 = vector.broadcast %14 : vector<1x128xf32> to vector<8x128xf32>
    %26 = arith.addf %24, %25 : vector<8x128xf32>
    %27 = math.tanh %26 : vector<8x128xf32>
    %c128 = arith.constant 128 : index
    %c0_15 = arith.constant 0 : index
    %28 = vector.load %arg1[%c128, %c0_15] : memref<528x128xf32, #tpu.memory_space<vmem>>, vector<128x128xf32>
    %cst_16 = arith.constant dense<0.000000e+00> : vector<8x128xf32>
    %29 = tpu.matmul %27, %28, %cst_16 {dimension_numbers = #tpu.dot_dimension_numbers<[1], [0], [0], [1], [0, 0, 1, 1], [], []>} : vector<8x128xf32>, vector<128x128xf32>, vector<8x128xf32> -> vector<8x128xf32>
    %30 = vector.broadcast %15 : vector<1x128xf32> to vector<8x128xf32>
    %31 = arith.addf %29, %30 : vector<8x128xf32>
    %32 = arith.negf %31 : vector<8x128xf32>
    %33 = math.exp %32 : vector<8x128xf32>
    %cst_17 = arith.constant 1.000000e+00 : f32
    %34 = vector.broadcast %cst_17 : f32 to vector<8x128xf32>
    %35 = arith.addf %34, %33 : vector<8x128xf32>
    %36 = arith.divf %34, %35 : vector<8x128xf32>
    %cst_18 = arith.constant 0.000000e+00 : f32
    %37 = vector.shape_cast %2 : vector<1x128xi1> to vector<1x128xi1>
    %38 = vector.broadcast %37 : vector<1x128xi1> to vector<8x128xi1>
    %39 = vector.broadcast %cst_18 : f32 to vector<8x128xf32>
    %40 = arith.select %38, %22, %39 : vector<8x128xi1>, vector<8x128xf32>
    %cst_19 = arith.constant dense<0.000000e+00> : vector<8xf32>
    %41 = vector.multi_reduction <add>, %40, %cst_19 [1] : vector<8x128xf32> to vector<8xf32>
    %42 = vector.shape_cast %41 : vector<8xf32> to vector<8x1xf32>
    %cst_20 = arith.constant 0.000000e+00 : f32
    %43 = vector.shape_cast %4 : vector<1x128xi1> to vector<1x128xi1>
    %44 = vector.broadcast %43 : vector<1x128xi1> to vector<8x128xi1>
    %45 = vector.broadcast %cst_20 : f32 to vector<8x128xf32>
    %46 = arith.select %44, %22, %45 : vector<8x128xi1>, vector<8x128xf32>
    %cst_21 = arith.constant dense<0.000000e+00> : vector<8xf32>
    %47 = vector.multi_reduction <add>, %46, %cst_21 [1] : vector<8x128xf32> to vector<8xf32>
    %48 = vector.shape_cast %47 : vector<8xf32> to vector<8x1xf32>
    %cst_22 = arith.constant 1.000000e-03 : f32
    %49 = vector.broadcast %cst_22 : f32 to vector<8x1xf32>
    %50 = arith.mulf %42, %49 : vector<8x1xf32>
    %cst_23 = arith.constant 1.000000e+00 : f32
    %cst_24 = arith.constant 0.000000e+00 : f32
    %51 = vector.broadcast %cst_23 : f32 to vector<1x128xf32>
    %52 = vector.broadcast %cst_24 : f32 to vector<1x128xf32>
    %53 = arith.select %11, %51, %52 : vector<1x128xi1>, vector<1x128xf32>
    %54 = vector.shape_cast %13 : vector<1x128xi1> to vector<1x128xi1>
    %55 = vector.broadcast %54 : vector<1x128xi1> to vector<8x128xi1>
    %56 = vector.shape_cast %50 : vector<8x1xf32> to vector<8x1xf32>
    %57 = vector.broadcast %56 : vector<8x1xf32> to vector<8x128xf32>
    %58 = vector.shape_cast %53 : vector<1x128xf32> to vector<1x128xf32>
    %59 = vector.broadcast %58 : vector<1x128xf32> to vector<8x128xf32>
    %60 = arith.select %55, %57, %59 : vector<8x128xi1>, vector<8x128xf32>
    %61 = vector.broadcast %48 : vector<8x1xf32> to vector<8x128xf32>
    %62 = arith.mulf %60, %61 : vector<8x128xf32>
    %63 = arith.mulf %36, %62 : vector<8x128xf32>
    %c384 = arith.constant 384 : index
    %c0_25 = arith.constant 0 : index
    %64 = vector.load %arg1[%c384, %c0_25] : memref<528x128xf32, #tpu.memory_space<vmem>>, vector<128x128xf32>
    %cst_26 = arith.constant dense<0.000000e+00> : vector<8x128xf32>
    %65 = tpu.matmul %63, %64, %cst_26 {dimension_numbers = #tpu.dot_dimension_numbers<[1], [0], [0], [1], [0, 0, 1, 1], [], []>} : vector<8x128xf32>, vector<128x128xf32>, vector<8x128xf32> -> vector<8x128xf32>
    %cst_27 = arith.constant 0.000000e+00 : f32
    %66 = vector.shape_cast %9 : vector<1x128xi1> to vector<1x128xi1>
    %67 = vector.broadcast %66 : vector<1x128xi1> to vector<8x128xi1>
    %68 = vector.broadcast %cst_27 : f32 to vector<8x128xf32>
    %69 = arith.select %67, %22, %68 : vector<8x128xi1>, vector<8x128xf32>
    %70 = arith.addf %69, %65 : vector<8x128xf32>
    %cst_28 = arith.constant 0.000000e+00 : f32
    %71 = vector.shape_cast %11 : vector<1x128xi1> to vector<1x128xi1>
    %72 = vector.broadcast %71 : vector<1x128xi1> to vector<8x128xi1>
    %73 = vector.broadcast %cst_28 : f32 to vector<8x128xf32>
    %74 = arith.select %72, %36, %73 : vector<8x128xi1>, vector<8x128xf32>
    %75 = arith.addf %70, %74 : vector<8x128xf32>
    %76 = vector.extract_strided_slice %75 {offsets = [0, 0], sizes = [1, 128], strides = [1, 1]} : vector<8x128xf32> to vector<1x128xf32>
    %77 = arith.index_cast %21 : i32 to index
    %c0_29 = arith.constant 0 : index
    %78 = vector.load %arg2[%77, %c0_29] : memref<8x128xf32, #tpu.memory_space<vmem>>, vector<1x128xf32>
    tpu.vector_store %arg2[%77, %c0_29], %76 {strides = array<i32>} : memref<8x128xf32, #tpu.memory_space<vmem>>, vector<1x128xf32>,
    %c256 = arith.constant 256 : index
    %c0_30 = arith.constant 0 : index
    %79 = vector.load %arg1[%c256, %c0_30] : memref<528x128xf32, #tpu.memory_space<vmem>>, vector<128x128xf32>
    %cst_31 = arith.constant dense<0.000000e+00> : vector<8x128xf32>
    %80 = tpu.matmul %22, %79, %cst_31 {dimension_numbers = #tpu.dot_dimension_numbers<[1], [0], [0], [1], [0, 0, 1, 1], [], []>} : vector<8x128xf32>, vector<128x128xf32>, vector<8x128xf32> -> vector<8x128xf32>
    %81 = arith.addf %80, %70 : vector<8x128xf32>
    %c0_32 = arith.constant 0 : index
    %c0_33 = arith.constant 0 : index
    %82 = vector.load %arg3[%c0_32, %c0_33] : memref<8x128xf32, #tpu.memory_space<vmem>>, vector<8x128xf32>
    tpu.vector_store %arg3[%c0_32, %c0_33], %81 {strides = array<i32>} : memref<8x128xf32, #tpu.memory_space<vmem>>, vector<8x128xf32>,
    %c1_i32_34 = arith.constant 1 : i32
    return
  }
}

</mosaic_0001>

<llo_original>
// kernel: tpu_custom_call.1
$region0: #{tpu_custom_call.1}
  #allocation0 [shape = 'u32[]', space=smem, size = 0x4, offset = 0x4, fixed_abs, tag = 'smem constant byte address 0x4 - core index']
  #allocation1 [shape = 'u32[144,128]{1,0:T(1,128)}', space=vmem, size = 0x12000, scoped, tag = 'internal scratch']
  #allocation2 [shape = 'f32[8,128]{1,0:T(8,128)}', space=vmem, size = 0x1000, scoped, tag = 'scratch operand']
  %s0 = inlined_call_operand.hbm [shape: f32[8,128], index: 0, kind: input, shape index: {}]
  %s1 = inlined_call_operand.hbm [shape: f32[528,128], index: 1, kind: input, shape index: {}]
  %s2 = inlined_call_operand.hbm [shape: f32[8,128], index: 2, kind: output, shape index: {}]
  %s3 = sld [smem:[#allocation0]]
  $region26: #{tpu_custom_call.1} parent=0
    _
  %s5 = ssub.s32 1, %s3
  %s6 = scalar_select 0, %s5, %s3
  $region1: #{tpu_custom_call.1} parent=0
    #allocation3 [shape = 'u8[4096]{0}', space=vmem, size = 0x1000, scoped, tag = 'input window, operand 0, single buffered']
    #allocation4 [shape = 's32[1]{0}', space=sflag, size = 0x4, scoped, tag = 'scoped memory for tpu_custom_call.1']
    #allocation5 [shape = 's32[1]{0}', space=sflag, size = 0x4, scoped, tag = 'scoped memory for tpu_custom_call.1']
    #allocation6 [shape = 'u8[270336]{0}', space=vmem, size = 0x42000, scoped, tag = 'input window, operand 1, single buffered']
    #allocation7 [shape = 's32[1]{0}', space=sflag, size = 0x4, scoped, tag = 'scoped memory for tpu_custom_call.1']
    #allocation8 [shape = 'u8[4096]{0}', space=vmem, size = 0x1000, scoped, tag = 'output window, operand 0, single buffered']
    %7 = vsyncpa [#allocation4], 0
    %8 = vsyncpa [#allocation7], 0
    %9 = vsyncpa [#allocation5], 0
    // Predicated region
    $region2: #{tpu_custom_call.1} parent=1 // pred_check
      _
    $region3: #{tpu_custom_call.1} parent=1 // pred_check_branch
      %11 = sbr.rel (0) target = $region5
    $region4: #{tpu_custom_call.1} parent=1 // pred_region
      %s13 = ssub.s32 128, 128
      %14 = vsyncadd [#allocation4], %s13
      %s16 = sshll.u32 [#allocation3], 4
      %s17 = int_to_ptr.vmem [resolvable:$true] %s16
      %19 = dma.hbm_to_vmem [thread:$0]  %s0, 128, %s17, [#allocation4]
    $region5: #{tpu_custom_call.1} parent=1 // pred_fallthru
      _
    // Predicated region
    $region6: #{tpu_custom_call.1} parent=1 // pred_check
      _
    $region7: #{tpu_custom_call.1} parent=1 // pred_check_branch
      %21 = sbr.rel (0) target = $region9
    $region8: #{tpu_custom_call.1} parent=1 // pred_region
      %s23 = ssub.s32 8448, 8448
      %24 = vsyncadd [#allocation7], %s23
      %s25 = sshll.u32 [#allocation6], 4
      %s26 = int_to_ptr.vmem [resolvable:$true] %s25
      %31 = dma.hbm_to_vmem [thread:$0]  %s1, 8448, %s26, [#allocation7], 128, 128, 8
    $region9: #{tpu_custom_call.1} parent=1 // pred_fallthru
      _
    // Predicated region
    $region10: #{tpu_custom_call.1} parent=1 // pred_check
      _
    $region11: #{tpu_custom_call.1} parent=1 // pred_check_branch
      %33 = sbr.rel (0) target = $region13
    $region12: #{tpu_custom_call.1} parent=1 // pred_region
      %34 = dma.done [#allocation4], 128
    $region13: #{tpu_custom_call.1} parent=1 // pred_fallthru
      _
    // Predicated region
    $region14: #{tpu_custom_call.1} parent=1 // pred_check
      _
    $region15: #{tpu_custom_call.1} parent=1 // pred_check_branch
      %36 = sbr.rel (0) target = $region17
    $region16: #{tpu_custom_call.1} parent=1 // pred_region
      %37 = dma.done [#allocation7], 8448
    $region17: #{tpu_custom_call.1} parent=1 // pred_fallthru
      _
    %v38 = vlaneseq
    %v39 = vand.u32 %v38, 127
    %vm40 = vcmp.eq.s32.totalorder %v39, 28
    %vm41 = vcmp.eq.s32.totalorder %v39, 29
    %vm42 = vcmp.ge.s32.totalorder %v39, 28
    %vm43 = vcmp.lt.s32.totalorder %v39, 32
    %vm44 = vmand %vm42, %vm43
    %vm45 = vcmp.lt.s32.totalorder %v39, 3
    %vm46 = vcmp.eq.s32.totalorder %v39, 0
    %v47 = vld [vmem:[#allocation6 + $0x200] sm:$0x1]
    %v48 = vld [vmem:[#allocation6 + $0x208] sm:$0x1]
    %49 = vst [vmem:[#allocation8] sm:$0xff] 0.0
    %v50 = vld [vmem:[#allocation3] sm:$0xff]
    %51 = vst [vmem:[#allocation2] sm:$0xff] %v50
    %v52 = vld [vmem:[#allocation2] sm:$0xff]
    %v53 = vld [vmem:[#allocation6] sm:$0xff]
    %v54 = vld [vmem:[#allocation6 + $0x8] sm:$0xff]
    %v55 = vld [vmem:[#allocation6 + $0x10] sm:$0xff]
    %v56 = vld [vmem:[#allocation6 + $0x18] sm:$0xff]
    %v57 = vld [vmem:[#allocation6 + $0x20] sm:$0xff]
    %v58 = vld [vmem:[#allocation6 + $0x28] sm:$0xff]
    %v59 = vld [vmem:[#allocation6 + $0x30] sm:$0xff]
    %v60 = vld [vmem:[#allocation6 + $0x38] sm:$0xff]
    %v61 = vld [vmem:[#allocation6 + $0x40] sm:$0xff]
    %v62 = vld [vmem:[#allocation6 + $0x48] sm:$0xff]
    %v63 = vld [vmem:[#allocation6 + $0x50] sm:$0xff]
    %v64 = vld [vmem:[#allocation6 + $0x58] sm:$0xff]
    %v65 = vld [vmem:[#allocation6 + $0x60] sm:$0xff]
    %v66 = vld [vmem:[#allocation6 + $0x68] sm:$0xff]
    %v67 = vld [vmem:[#allocation6 + $0x70] sm:$0xff]
    %v68 = vld [vmem:[#allocation6 + $0x78] sm:$0xff]
    %v69 = vlaneseq
    %v70 = vshrl.u32 %v69, 7
    %v71 = vsub.s32 0, %v70
    %v72 = vrot.slane %v47, %v71
    %73 = vmatprep.subr.mxu0 0.0
    %74 = vmatpush1.msra.mxu0 %v53
    %75 = vmatprep.subr.mxu0 0.0
    %76 = vmatpush1.msra.mxu0 %v54
    %77 = vmatprep.subr.mxu0 0.0
    %78 = vmatpush1.msra.mxu0 %v55
    %79 = vmatprep.subr.mxu0 0.0
    %80 = vmatpush1.msra.mxu0 %v56
    %81 = vmatprep.subr.mxu0 0.0
    %82 = vmatpush1.msra.mxu0 %v57
    %83 = vmatprep.subr.mxu0 0.0
    %84 = vmatpush1.msra.mxu0 %v58
    %85 = vmatprep.subr.mxu0 0.0
    %86 = vmatpush1.msra.mxu0 %v59
    %87 = vmatprep.subr.mxu0 0.0
    %88 = vmatpush1.msra.mxu0 %v60
    %89 = vmatprep.subr.mxu0 0.0
    %90 = vmatpush1.msra.mxu0 %v61
    %91 = vmatprep.subr.mxu0 0.0
    %92 = vmatpush1.msra.mxu0 %v62
    %93 = vmatprep.subr.mxu0 0.0
    %94 = vmatpush1.msra.mxu0 %v63
    %95 = vmatprep.subr.mxu0 0.0
    %96 = vmatpush1.msra.mxu0 %v64
    %97 = vmatprep.subr.mxu0 0.0
    %98 = vmatpush1.msra.mxu0 %v65
    %99 = vmatprep.subr.mxu0 0.0
    %100 = vmatpush1.msra.mxu0 %v66
    %101 = vmatprep.subr.mxu0 0.0
    %102 = vmatpush1.msra.mxu0 %v67
    %103 = vmatprep.subr.mxu0 0.0
    %104 = vmatpush1.msra.mxu0 %v68
    %105 = vmatprep.subr.mxu0 0.0
    %106 = vmatpush1.msra.mxu0 0.0
    %107 = vmatprep.subr.mxu0 0.0
    %108 = vmatpush1.msra.mxu0 0.0
    %109 = vmatprep.subr.mxu0 0.0
    %110 = vmatpush1.msra.mxu0 0.0
    %111 = vmatprep.subr.mxu0 0.0
    %112 = vmatpush1.msra.mxu0 0.0
    %113 = vmatprep.subr.mxu0 0.0
    %114 = vmatpush1.msra.mxu0 0.0
    %115 = vmatprep.subr.mxu0 0.0
    %116 = vmatpush1.msra.mxu0 0.0
    %117 = vmatprep.subr.mxu0 0.0
    %118 = vmatpush1.msra.mxu0 0.0
    %119 = vmatprep.subr.mxu0 0.0
    %120 = vmatpush1.msra.mxu0 0.0
    %121 = vmatprep.subr.mxu0 0.0
    %122 = vmatpush1.msra.mxu0 0.0
    %123 = vmatprep.subr.mxu0 0.0
    %124 = vmatpush1.msra.mxu0 0.0
    %125 = vmatprep.subr.mxu0 0.0
    %126 = vmatpush1.msra.mxu0 0.0
    %127 = vmatprep.subr.mxu0 0.0
    %128 = vmatpush1.msra.mxu0 0.0
    %129 = vmatprep.subr.mxu0 0.0
    %130 = vmatpush1.msra.mxu0 0.0
    %131 = vmatprep.subr.mxu0 0.0
    %132 = vmatpush1.msra.mxu0 0.0
    %133 = vmatprep.subr.mxu0 0.0
    %134 = vmatpush1.msra.mxu0 0.0
    %135 = vmatprep.subr.mxu0 0.0
    %136 = vmatpush1.msra.mxu0 0.0
    %137 = vmatprep.mubr.f32.mxu0 0.0
    %138 = vmatmul.mubr.f32.gmra.mrb[0].mxu0 %v52
    %v139 = vpop.f32.mrb[0].mxu0
    %v140 = vadd.f32 %v72, %v139
    %v141 = vpop.f32.mrb[0].mxu0
    %142 = vdwg.mxu0
    %v143 = vtanh.pop %v140
    %v144 = vld [vmem:[#allocation6 + $0x80] sm:$0xff]
    %v145 = vld [vmem:[#allocation6 + $0x88] sm:$0xff]
    %v146 = vld [vmem:[#allocation6 + $0x90] sm:$0xff]
    %v147 = vld [vmem:[#allocation6 + $0x98] sm:$0xff]
    %v148 = vld [vmem:[#allocation6 + $0xa0] sm:$0xff]
    %v149 = vld [vmem:[#allocation6 + $0xa8] sm:$0xff]
    %v150 = vld [vmem:[#allocation6 + $0xb0] sm:$0xff]
    %v151 = vld [vmem:[#allocation6 + $0xb8] sm:$0xff]
    %v152 = vld [vmem:[#allocation6 + $0xc0] sm:$0xff]
    %v153 = vld [vmem:[#allocation6 + $0xc8] sm:$0xff]
    %v154 = vld [vmem:[#allocation6 + $0xd0] sm:$0xff]
    %v155 = vld [vmem:[#allocation6 + $0xd8] sm:$0xff]
    %v156 = vld [vmem:[#allocation6 + $0xe0] sm:$0xff]
    %v157 = vld [vmem:[#allocation6 + $0xe8] sm:$0xff]
    %v158 = vld [vmem:[#allocation6 + $0xf0] sm:$0xff]
    %v159 = vld [vmem:[#allocation6 + $0xf8] sm:$0xff]
    %v160 = vlaneseq
    %v161 = vshrl.u32 %v160, 7
    %v162 = vsub.s32 0, %v161
    %v163 = vrot.slane %v48, %v162
    %164 = vmatprep.subr.mxu0 0.0
    %165 = vmatpush1.msra.mxu0 %v144
    %166 = vmatprep.subr.mxu0 0.0
    %167 = vmatpush1.msra.mxu0 %v145
    %168 = vmatprep.subr.mxu0 0.0
    %169 = vmatpush1.msra.mxu0 %v146
    %170 = vmatprep.subr.mxu0 0.0
    %171 = vmatpush1.msra.mxu0 %v147
    %172 = vmatprep.subr.mxu0 0.0
    %173 = vmatpush1.msra.mxu0 %v148
    %174 = vmatprep.subr.mxu0 0.0
    %175 = vmatpush1.msra.mxu0 %v149
    %176 = vmatprep.subr.mxu0 0.0
    %177 = vmatpush1.msra.mxu0 %v150
    %178 = vmatprep.subr.mxu0 0.0
    %179 = vmatpush1.msra.mxu0 %v151
    %180 = vmatprep.subr.mxu0 0.0
    %181 = vmatpush1.msra.mxu0 %v152
    %182 = vmatprep.subr.mxu0 0.0
    %183 = vmatpush1.msra.mxu0 %v153
    %184 = vmatprep.subr.mxu0 0.0
    %185 = vmatpush1.msra.mxu0 %v154
    %186 = vmatprep.subr.mxu0 0.0
    %187 = vmatpush1.msra.mxu0 %v155
    %188 = vmatprep.subr.mxu0 0.0
    %189 = vmatpush1.msra.mxu0 %v156
    %190 = vmatprep.subr.mxu0 0.0
    %191 = vmatpush1.msra.mxu0 %v157
    %192 = vmatprep.subr.mxu0 0.0
    %193 = vmatpush1.msra.mxu0 %v158
    %194 = vmatprep.subr.mxu0 0.0
    %195 = vmatpush1.msra.mxu0 %v159
    %196 = vmatprep.subr.mxu0 0.0
    %197 = vmatpush1.msra.mxu0 0.0
    %198 = vmatprep.subr.mxu0 0.0
    %199 = vmatpush1.msra.mxu0 0.0
    %200 = vmatprep.subr.mxu0 0.0
    %201 = vmatpush1.msra.mxu0 0.0
    %202 = vmatprep.subr.mxu0 0.0
    %203 = vmatpush1.msra.mxu0 0.0
    %204 = vmatprep.subr.mxu0 0.0
    %205 = vmatpush1.msra.mxu0 0.0
    %206 = vmatprep.subr.mxu0 0.0
    %207 = vmatpush1.msra.mxu0 0.0
    %208 = vmatprep.subr.mxu0 0.0
    %209 = vmatpush1.msra.mxu0 0.0
    %210 = vmatprep.subr.mxu0 0.0
    %211 = vmatpush1.msra.mxu0 0.0
    %212 = vmatprep.subr.mxu0 0.0
    %213 = vmatpush1.msra.mxu0 0.0
    %214 = vmatprep.subr.mxu0 0.0
    %215 = vmatpush1.msra.mxu0 0.0
    %216 = vmatprep.subr.mxu0 0.0
    %217 = vmatpush1.msra.mxu0 0.0
    %218 = vmatprep.subr.mxu0 0.0
    %219 = vmatpush1.msra.mxu0 0.0
    %220 = vmatprep.subr.mxu0 0.0
    %221 = vmatpush1.msra.mxu0 0.0
    %222 = vmatprep.subr.mxu0 0.0
    %223 = vmatpush1.msra.mxu0 0.0
    %224 = vmatprep.subr.mxu0 0.0
    %225 = vmatpush1.msra.mxu0 0.0
    %226 = vmatprep.subr.mxu0 0.0
    %227 = vmatpush1.msra.mxu0 0.0
    %228 = vmatprep.mubr.f32.mxu0 0.0
    %229 = vmatmul.mubr.f32.gmra.mrb[0].mxu0 %v143
    %v230 = vpop.f32.mrb[0].mxu0
    %v231 = vadd.f32 %v163, %v230
    %v232 = vpop.f32.mrb[0].mxu0
    %233 = vdwg.mxu0
    %v234 = vxor.u32 %v231, 2147483648
    %v235 = vmul.f32 %v234, 1.442695
    %v236 = vpow.pop %v235
    %v237 = vadd.f32 %v236, 1.0
    %v238 = vrcp.pop %v237
    %v239 = vmul.f32 1.0, %v238
    %v240 = vsel %vm40, 1, 0
    %vm241 = vcmp.eq.s32.totalorder %v240, 1
    %v242 = vsel %vm241, %v52, 0.0
    %243 = vadd.xlane.f32.xlu0 %v242
    %v244 = vpop.xlane.xlu0 %243
    %v245 = vsel %vm41, 1, 0
    %vm246 = vcmp.eq.s32.totalorder %v245, 1
    %v247 = vsel %vm246, %v52, 0.0
    %248 = vadd.xlane.f32.xlu0 %v247
    %v249 = vpop.xlane.xlu0 %248
    %v250 = vmul.f32 %v244, 0.001
    %v251 = vsel %vm45, 1.0, 0.0
    %v252 = vsel %vm46, 1, 0
    %vm253 = vcmp.eq.s32.totalorder %v252, 1
    %v254 = vsel %vm253, %v250, %v251
    %v255 = vmul.f32 %v254, %v249
    %v256 = vmul.f32 %v239, %v255
    %v257 = vld [vmem:[#allocation6 + $0x180] sm:$0xff]
    %v258 = vld [vmem:[#allocation6 + $0x188] sm:$0xff]
    %v259 = vld [vmem:[#allocation6 + $0x190] sm:$0xff]
    %v260 = vld [vmem:[#allocation6 + $0x198] sm:$0xff]
    %v261 = vld [vmem:[#allocation6 + $0x1a0] sm:$0xff]
    %v262 = vld [vmem:[#allocation6 + $0x1a8] sm:$0xff]
    %v263 = vld [vmem:[#allocation6 + $0x1b0] sm:$0xff]
    %v264 = vld [vmem:[#allocation6 + $0x1b8] sm:$0xff]
    %v265 = vld [vmem:[#allocation6 + $0x1c0] sm:$0xff]
    %v266 = vld [vmem:[#allocation6 + $0x1c8] sm:$0xff]
    %v267 = vld [vmem:[#allocation6 + $0x1d0] sm:$0xff]
    %v268 = vld [vmem:[#allocation6 + $0x1d8] sm:$0xff]
    %v269 = vld [vmem:[#allocation6 + $0x1e0] sm:$0xff]
    %v270 = vld [vmem:[#allocation6 + $0x1e8] sm:$0xff]
    %v271 = vld [vmem:[#allocation6 + $0x1f0] sm:$0xff]
    %v272 = vld [vmem:[#allocation6 + $0x1f8] sm:$0xff]
    %273 = vmatprep.subr.mxu0 0.0
    %274 = vmatpush1.msra.mxu0 %v257
    %275 = vmatprep.subr.mxu0 0.0
    %276 = vmatpush1.msra.mxu0 %v258
    %277 = vmatprep.subr.mxu0 0.0
    %278 = vmatpush1.msra.mxu0 %v259
    %279 = vmatprep.subr.mxu0 0.0
    %280 = vmatpush1.msra.mxu0 %v260
    %281 = vmatprep.subr.mxu0 0.0
    %282 = vmatpush1.msra.mxu0 %v261
    %283 = vmatprep.subr.mxu0 0.0
    %284 = vmatpush1.msra.mxu0 %v262
    %285 = vmatprep.subr.mxu0 0.0
    %286 = vmatpush1.msra.mxu0 %v263
    %287 = vmatprep.subr.mxu0 0.0
    %288 = vmatpush1.msra.mxu0 %v264
    %289 = vmatprep.subr.mxu0 0.0
    %290 = vmatpush1.msra.mxu0 %v265
    %291 = vmatprep.subr.mxu0 0.0
    %292 = vmatpush1.msra.mxu0 %v266
    %293 = vmatprep.subr.mxu0 0.0
    %294 = vmatpush1.msra.mxu0 %v267
    %295 = vmatprep.subr.mxu0 0.0
    %296 = vmatpush1.msra.mxu0 %v268
    %297 = vmatprep.subr.mxu0 0.0
    %298 = vmatpush1.msra.mxu0 %v269
    %299 = vmatprep.subr.mxu0 0.0
    %300 = vmatpush1.msra.mxu0 %v270
    %301 = vmatprep.subr.mxu0 0.0
    %302 = vmatpush1.msra.mxu0 %v271
    %303 = vmatprep.subr.mxu0 0.0
    %304 = vmatpush1.msra.mxu0 %v272
    %305 = vmatprep.subr.mxu0 0.0
    %306 = vmatpush1.msra.mxu0 0.0
    %307 = vmatprep.subr.mxu0 0.0
    %308 = vmatpush1.msra.mxu0 0.0
    %309 = vmatprep.subr.mxu0 0.0
    %310 = vmatpush1.msra.mxu0 0.0
    %311 = vmatprep.subr.mxu0 0.0
    %312 = vmatpush1.msra.mxu0 0.0
    %313 = vmatprep.subr.mxu0 0.0
    %314 = vmatpush1.msra.mxu0 0.0
    %315 = vmatprep.subr.mxu0 0.0
    %316 = vmatpush1.msra.mxu0 0.0
    %317 = vmatprep.subr.mxu0 0.0
    %318 = vmatpush1.msra.mxu0 0.0
    %319 = vmatprep.subr.mxu0 0.0
    %320 = vmatpush1.msra.mxu0 0.0
    %321 = vmatprep.subr.mxu0 0.0
    %322 = vmatpush1.msra.mxu0 0.0
    %323 = vmatprep.subr.mxu0 0.0
    %324 = vmatpush1.msra.mxu0 0.0
    %325 = vmatprep.subr.mxu0 0.0
    %326 = vmatpush1.msra.mxu0 0.0
    %327 = vmatprep.subr.mxu0 0.0
    %328 = vmatpush1.msra.mxu0 0.0
    %329 = vmatprep.subr.mxu0 0.0
    %330 = vmatpush1.msra.mxu0 0.0
    %331 = vmatprep.subr.mxu0 0.0
    %332 = vmatpush1.msra.mxu0 0.0
    %333 = vmatprep.subr.mxu0 0.0
    %334 = vmatpush1.msra.mxu0 0.0
    %335 = vmatprep.subr.mxu0 0.0
    %336 = vmatpush1.msra.mxu0 0.0
    %337 = vmatprep.mubr.f32.mxu0 0.0
    %338 = vmatmul.mubr.f32.gmra.mrb[0].mxu0 %v256
    %v339 = vpop.f32.mrb[0].mxu0
    %v340 = vadd.f32 0.0, %v339
    %v341 = vpop.f32.mrb[0].mxu0
    %342 = vdwg.mxu0
    %v343 = vsel %vm44, 1, 0
    %vm344 = vcmp.eq.s32.totalorder %v343, 1
    %v345 = vsel %vm344, %v52, 0.0
    %v346 = vadd.f32 %v345, %v340
    %v347 = vsel %vm45, 1, 0
    %vm348 = vcmp.eq.s32.totalorder %v347, 1
    %v349 = vsel %vm348, %v239, 0.0
    %v350 = vadd.f32 %v346, %v349
    %351 = vst [vmem:[#allocation8] sm:$0x1] %v350
    %v352 = vld [vmem:[#allocation6 + $0x100] sm:$0xff]
    %v353 = vld [vmem:[#allocation6 + $0x108] sm:$0xff]
    %v354 = vld [vmem:[#allocation6 + $0x110] sm:$0xff]
    %v355 = vld [vmem:[#allocation6 + $0x118] sm:$0xff]
    %v356 = vld [vmem:[#allocation6 + $0x120] sm:$0xff]
    %v357 = vld [vmem:[#allocation6 + $0x128] sm:$0xff]
    %v358 = vld [vmem:[#allocation6 + $0x130] sm:$0xff]
    %v359 = vld [vmem:[#allocation6 + $0x138] sm:$0xff]
    %v360 = vld [vmem:[#allocation6 + $0x140] sm:$0xff]
    %v361 = vld [vmem:[#allocation6 + $0x148] sm:$0xff]
    %v362 = vld [vmem:[#allocation6 + $0x150] sm:$0xff]
    %v363 = vld [vmem:[#allocation6 + $0x158] sm:$0xff]
    %v364 = vld [vmem:[#allocation6 + $0x160] sm:$0xff]
    %v365 = vld [vmem:[#allocation6 + $0x168] sm:$0xff]
    %v366 = vld [vmem:[#allocation6 + $0x170] sm:$0xff]
    %v367 = vld [vmem:[#allocation6 + $0x178] sm:$0xff]
    %368 = vmatprep.subr.mxu0 0.0
    %369 = vmatpush1.msra.mxu0 %v352
    %370 = vmatprep.subr.mxu0 0.0
    %371 = vmatpush1.msra.mxu0 %v353
    %372 = vmatprep.subr.mxu0 0.0
    %373 = vmatpush1.msra.mxu0 %v354
    %374 = vmatprep.subr.mxu0 0.0
    %375 = vmatpush1.msra.mxu0 %v355
    %376 = vmatprep.subr.mxu0 0.0
    %377 = vmatpush1.msra.mxu0 %v356
    %378 = vmatprep.subr.mxu0 0.0
    %379 = vmatpush1.msra.mxu0 %v357
    %380 = vmatprep.subr.mxu0 0.0
    %381 = vmatpush1.msra.mxu0 %v358
    %382 = vmatprep.subr.mxu0 0.0
    %383 = vmatpush1.msra.mxu0 %v359
    %384 = vmatprep.subr.mxu0 0.0
    %385 = vmatpush1.msra.mxu0 %v360
    %386 = vmatprep.subr.mxu0 0.0
    %387 = vmatpush1.msra.mxu0 %v361
    %388 = vmatprep.subr.mxu0 0.0
    %389 = vmatpush1.msra.mxu0 %v362
    %390 = vmatprep.subr.mxu0 0.0
    %391 = vmatpush1.msra.mxu0 %v363
    %392 = vmatprep.subr.mxu0 0.0
    %393 = vmatpush1.msra.mxu0 %v364
    %394 = vmatprep.subr.mxu0 0.0
    %395 = vmatpush1.msra.mxu0 %v365
    %396 = vmatprep.subr.mxu0 0.0
    %397 = vmatpush1.msra.mxu0 %v366
    %398 = vmatprep.subr.mxu0 0.0
    %399 = vmatpush1.msra.mxu0 %v367
    %400 = vmatprep.subr.mxu0 0.0
    %401 = vmatpush1.msra.mxu0 0.0
    %402 = vmatprep.subr.mxu0 0.0
    %403 = vmatpush1.msra.mxu0 0.0
    %404 = vmatprep.subr.mxu0 0.0
    %405 = vmatpush1.msra.mxu0 0.0
    %406 = vmatprep.subr.mxu0 0.0
    %407 = vmatpush1.msra.mxu0 0.0
    %408 = vmatprep.subr.mxu0 0.0
    %409 = vmatpush1.msra.mxu0 0.0
    %410 = vmatprep.subr.mxu0 0.0
    %411 = vmatpush1.msra.mxu0 0.0
    %412 = vmatprep.subr.mxu0 0.0
    %413 = vmatpush1.msra.mxu0 0.0
    %414 = vmatprep.subr.mxu0 0.0
    %415 = vmatpush1.msra.mxu0 0.0
    %416 = vmatprep.subr.mxu0 0.0
    %417 = vmatpush1.msra.mxu0 0.0
    %418 = vmatprep.subr.mxu0 0.0
    %419 = vmatpush1.msra.mxu0 0.0
    %420 = vmatprep.subr.mxu0 0.0
    %421 = vmatpush1.msra.mxu0 0.0
    %422 = vmatprep.subr.mxu0 0.0
    %423 = vmatpush1.msra.mxu0 0.0
    %424 = vmatprep.subr.mxu0 0.0
    %425 = vmatpush1.msra.mxu0 0.0
    %426 = vmatprep.subr.mxu0 0.0
    %427 = vmatpush1.msra.mxu0 0.0
    %428 = vmatprep.subr.mxu0 0.0
    %429 = vmatpush1.msra.mxu0 0.0
    %430 = vmatprep.subr.mxu0 0.0
    %431 = vmatpush1.msra.mxu0 0.0
    %432 = vmatprep.mubr.f32.mxu0 0.0
    %433 = vmatmul.mubr.f32.gmra.mrb[0].mxu0 %v52
    %v434 = vpop.f32.mrb[0].mxu0
    %v435 = vadd.f32 %v346, %v434
    %v436 = vpop.f32.mrb[0].mxu0
    %437 = vdwg.mxu0
    %438 = vst [vmem:[#allocation2] sm:$0xff] %v435
    // Predicated region
    $region18: #{tpu_custom_call.1} parent=1 // pred_check
      _
    $region19: #{tpu_custom_call.1} parent=1 // pred_check_branch
      %440 = sbr.rel (0) target = $region21
    $region20: #{tpu_custom_call.1} parent=1 // pred_region
      %s442 = ssub.s32 128, 128
      %443 = vsyncadd [#allocation5], %s442
      %s445 = sshll.u32 [#allocation8], 4
      %s446 = int_to_ptr.vmem [resolvable:$true] %s445
      %448 = dma.vmem_to_hbm [thread:$0]  %s446, 128, %s2, [#allocation5]
    $region21: #{tpu_custom_call.1} parent=1 // pred_fallthru
      _
    // Predicated region
    $region22: #{tpu_custom_call.1} parent=1 // pred_check
      _
    $region23: #{tpu_custom_call.1} parent=1 // pred_check_branch
      %450 = sbr.rel (0) target = $region25
    $region24: #{tpu_custom_call.1} parent=1 // pred_region
      %451 = dma.done [#allocation5], 128
    $region25: #{tpu_custom_call.1} parent=1 // pred_fallthru
      _
    %452 = vsyncpa [#allocation4], 1
    %453 = vsyncpa [#allocation7], 1
    %454 = vsyncpa [#allocation5], 1

</llo_original>
